<compile_context>
chip_gen: v5e
topology: v5e:2x2
jax: 0.10.0
libtpu: 0.0.40
codegen_flags: <defaults>
</compile_context>

<pallas_src>
import jax
import jax.numpy as jnp
from jax.experimental import pallas as pl
from jax.experimental.pallas import tpu as pltpu


def make_nfm_kernel(n_hidden):
    def bn_relu(y, gamma, beta):
        # nn.BatchNorm1d in training mode, transposed layout: features on rows,
        # batch on lanes -> reduce over axis=1 (biased variance, eps=1e-5).
        mean = jnp.mean(y, axis=1, keepdims=True)
        var = jnp.mean(jnp.square(y - mean), axis=1, keepdims=True)
        z = (y - mean) * jax.lax.rsqrt(var + 1e-5) * gamma + beta
        return jnp.maximum(z, 0.0)

    def mxu_dot(a, b):
        return jnp.dot(a.astype(jnp.bfloat16), b.astype(jnp.bfloat16),
                       preferred_element_type=jnp.float32)

    def kernel(*refs):
        out_ref = refs[-1]
        it = iter(refs[:-1])
        bias_t = next(it)[...]       # (F, B)   gathered emb_bias, transposed
        fac = next(it)[...]          # (F, D, B) gathered emb_factor, transposed
        layers = [tuple(next(it)[...] for _ in range(4)) for _ in range(n_hidden)]
        fw = next(it)[...]           # (1, H_last)  final Linear weight
        fb = next(it)[...]           # (1, 1)       final Linear bias

        # ---- first-order bias term: sum over fields -> (1, B) ----
        linear = jnp.sum(bias_t, axis=0, keepdims=True)

        # ---- bi-interaction (per-field variant of this module) ----
        # dot[f, b] = sum_d fac[f,d,b] * (sum_f' fac[f',d,b] - fac[f,d,b])
        s = jnp.sum(fac, axis=0, keepdims=True)          # (1, D, B)
        dot = jnp.sum(fac * (s - fac), axis=1)           # (F, B)

        # ---- dense part: [Linear -> BN -> ReLU]* -> Linear ----
        h = dot
        for (w, b, g, bt) in layers:                     # w: (H_out, H_in), b/g/bt: (H_out, 1)
            y = mxu_dot(w, h) + b                        # (H_out, B)
            h = bn_relu(y, g, bt)
        dense = mxu_dot(fw, h) + fb                      # (1, B)

        out_ref[...] = linear + dense                    # single lane-dense store

    return kernel


def init_params(key, feature_num, field_num, latent_num, hidden_layers):
    dims = [field_num] + list(hidden_layers)
    keys = iter(jax.random.split(key, 4 + 2 * len(hidden_layers) + 2))

    def nrm(shape, scale=1.0):
        return (scale * jax.random.normal(next(keys), shape)).astype(jnp.float32)

    params = {
        "emb_bias": nrm((feature_num, 1)),
        "emb_factor": nrm((feature_num, latent_num)),
        "dense": [],
    }
    for i in range(len(hidden_layers)):
        d_in, d_out = dims[i], dims[i + 1]
        w = nrm((d_out, d_in), (1.0 / d_in) ** 0.5)          # torch (out, in) layout
        b = nrm((d_out, 1), (1.0 / d_in) ** 0.5)
        gamma = jnp.ones((d_out, 1), jnp.float32)            # BatchNorm1d default init
        beta = jnp.zeros((d_out, 1), jnp.float32)
        params["dense"].append((w, b, gamma, beta))
    params["final_w"] = nrm((1, dims[-1]), (1.0 / dims[-1]) ** 0.5)
    params["final_b"] = nrm((1, 1), (1.0 / dims[-1]) ** 0.5)
    return params


def nfm_forward(x_idx, params, field_num, latent_num, hidden_layers):
    B, F = x_idx.shape
    assert F == field_num

    # Glue: embedding gathers + lane-dense (batch-on-lanes) layout prep.
    bias_t = params["emb_bias"][x_idx][..., 0].T              # (F, B)
    factor = params["emb_factor"][x_idx]                      # (B, F, D)
    fac_t = jnp.transpose(factor, (1, 2, 0))                  # (F, D, B)

    inputs = [bias_t, fac_t]
    for p in params["dense"]:
        inputs += list(p)
    inputs += [params["final_w"], params["final_b"]]

    kernel = make_nfm_kernel(len(hidden_layers))
    out_t = pl.pallas_call(
        kernel,
        out_shape=jax.ShapeDtypeStruct((1, B), jnp.float32),
        in_specs=[pl.BlockSpec(memory_space=pltpu.MemorySpace.VMEM)] * len(inputs),
        out_specs=pl.BlockSpec(memory_space=pltpu.MemorySpace.VMEM),
    )(*inputs)
    return out_t.T                                            # (B, 1)


if __name__ == "__main__":
    feature_num, field_num, latent_num = 32, 8, 16
    hidden_layers = [64, 32]
    B = 256  # multiple of 128 so the batch (lane) axis is dense

    key = jax.random.PRNGKey(0)
    kx, kp = jax.random.split(key)
    x = jax.random.randint(kx, (B, field_num), 0, feature_num, dtype=jnp.int32)
    params = init_params(kp, feature_num, field_num, latent_num, hidden_layers)

    out = nfm_forward(x, params, field_num, latent_num, hidden_layers)
    out = jax.block_until_ready(out)
    assert out.shape == (B, 1) and out.dtype == jnp.float32
    assert bool(jnp.all(jnp.isfinite(out)))
    print("KERNEL_OK")
</pallas_src>

<mosaic_0001>
module attributes {stable_mosaic.version = 11 : i64} {
  func.func @kernel(%arg0: memref<8x256xf32, #tpu.memory_space<vmem>>, %arg1: memref<8x16x256xf32, #tpu.memory_space<vmem>>, %arg2: memref<64x8xf32, #tpu.memory_space<vmem>>, %arg3: memref<64x1xf32, #tpu.memory_space<vmem>>, %arg4: memref<64x1xf32, #tpu.memory_space<vmem>>, %arg5: memref<64x1xf32, #tpu.memory_space<vmem>>, %arg6: memref<32x64xf32, #tpu.memory_space<vmem>>, %arg7: memref<32x1xf32, #tpu.memory_space<vmem>>, %arg8: memref<32x1xf32, #tpu.memory_space<vmem>>, %arg9: memref<32x1xf32, #tpu.memory_space<vmem>>, %arg10: memref<1x32xf32, #tpu.memory_space<vmem>>, %arg11: memref<1x1xf32, #tpu.memory_space<vmem>>, %arg12: memref<1x256xf32, #tpu.memory_space<vmem>>) attributes {dimension_semantics = [], scalar_prefetch = 0 : i64, scratch_operands = 0 : i64, tpu.core_type = #tpu.core_type<tc>} {
    %c0 = arith.constant 0 : index
    %c0_0 = arith.constant 0 : index
    %0 = vector.load %arg0[%c0, %c0_0] : memref<8x256xf32, #tpu.memory_space<vmem>>, vector<8x256xf32>
    %c0_1 = arith.constant 0 : index
    %c0_2 = arith.constant 0 : index
    %c0_3 = arith.constant 0 : index
    %1 = vector.load %arg1[%c0_1, %c0_2, %c0_3] : memref<8x16x256xf32, #tpu.memory_space<vmem>>, vector<8x16x256xf32>
    %c0_4 = arith.constant 0 : index
    %c0_5 = arith.constant 0 : index
    %2 = vector.load %arg2[%c0_4, %c0_5] : memref<64x8xf32, #tpu.memory_space<vmem>>, vector<64x8xf32>
    %c0_6 = arith.constant 0 : index
    %c0_7 = arith.constant 0 : index
    %3 = vector.load %arg3[%c0_6, %c0_7] : memref<64x1xf32, #tpu.memory_space<vmem>>, vector<64x1xf32>
    %c0_8 = arith.constant 0 : index
    %c0_9 = arith.constant 0 : index
    %4 = vector.load %arg4[%c0_8, %c0_9] : memref<64x1xf32, #tpu.memory_space<vmem>>, vector<64x1xf32>
    %c0_10 = arith.constant 0 : index
    %c0_11 = arith.constant 0 : index
    %5 = vector.load %arg5[%c0_10, %c0_11] : memref<64x1xf32, #tpu.memory_space<vmem>>, vector<64x1xf32>
    %c0_12 = arith.constant 0 : index
    %c0_13 = arith.constant 0 : index
    %6 = vector.load %arg6[%c0_12, %c0_13] : memref<32x64xf32, #tpu.memory_space<vmem>>, vector<32x64xf32>
    %c0_14 = arith.constant 0 : index
    %c0_15 = arith.constant 0 : index
    %7 = vector.load %arg7[%c0_14, %c0_15] : memref<32x1xf32, #tpu.memory_space<vmem>>, vector<32x1xf32>
    %c0_16 = arith.constant 0 : index
    %c0_17 = arith.constant 0 : index
    %8 = vector.load %arg8[%c0_16, %c0_17] : memref<32x1xf32, #tpu.memory_space<vmem>>, vector<32x1xf32>
    %c0_18 = arith.constant 0 : index
    %c0_19 = arith.constant 0 : index
    %9 = vector.load %arg9[%c0_18, %c0_19] : memref<32x1xf32, #tpu.memory_space<vmem>>, vector<32x1xf32>
    %c0_20 = arith.constant 0 : index
    %c0_21 = arith.constant 0 : index
    %10 = vector.load %arg10[%c0_20, %c0_21] : memref<1x32xf32, #tpu.memory_space<vmem>>, vector<1x32xf32>
    %c0_22 = arith.constant 0 : index
    %c0_23 = arith.constant 0 : index
    %11 = vector.load %arg11[%c0_22, %c0_23] : memref<1x1xf32, #tpu.memory_space<vmem>>, vector<1x1xf32>
    %cst = arith.constant dense<0.000000e+00> : vector<256xf32>
    %12 = vector.multi_reduction <add>, %0, %cst [0] : vector<8x256xf32> to vector<256xf32>
    %13 = vector.shape_cast %12 : vector<256xf32> to vector<1x256xf32>
    %cst_24 = arith.constant dense<0.000000e+00> : vector<16x256xf32>
    %14 = vector.multi_reduction <add>, %1, %cst_24 [0] : vector<8x16x256xf32> to vector<16x256xf32>
    %15 = vector.shape_cast %14 : vector<16x256xf32> to vector<1x16x256xf32>
    %16 = vector.broadcast %15 : vector<1x16x256xf32> to vector<8x16x256xf32>
    %17 = arith.subf %16, %1 : vector<8x16x256xf32>
    %18 = arith.mulf %1, %17 : vector<8x16x256xf32>
    %cst_25 = arith.constant dense<0.000000e+00> : vector<8x256xf32>
    %19 = vector.multi_reduction <add>, %18, %cst_25 [1] : vector<8x16x256xf32> to vector<8x256xf32>
    %20 = arith.truncf %2 : vector<64x8xf32> to vector<64x8xbf16>
    %21 = arith.truncf %19 : vector<8x256xf32> to vector<8x256xbf16>
    %cst_26 = arith.constant dense<0.000000e+00> : vector<64x256xf32>
    %22 = tpu.matmul %20, %21, %cst_26 {dimension_numbers = #tpu.dot_dimension_numbers<[1], [0], [0], [1], [0, 0, 1, 1], [], []>} : vector<64x8xbf16>, vector<8x256xbf16>, vector<64x256xf32> -> vector<64x256xf32>
    %23 = vector.broadcast %3 : vector<64x1xf32> to vector<64x256xf32>
    %24 = arith.addf %22, %23 : vector<64x256xf32>
    %cst_27 = arith.constant dense<0.000000e+00> : vector<64xf32>
    %25 = vector.multi_reduction <add>, %24, %cst_27 [1] : vector<64x256xf32> to vector<64xf32>
    %26 = vector.shape_cast %25 : vector<64xf32> to vector<64x1xf32>
    %cst_28 = arith.constant 2.560000e+02 : f32
    %27 = vector.broadcast %cst_28 : f32 to vector<64x1xf32>
    %28 = arith.divf %26, %27 : vector<64x1xf32>
    %29 = vector.broadcast %28 : vector<64x1xf32> to vector<64x256xf32>
    %30 = arith.subf %24, %29 : vector<64x256xf32>
    %31 = arith.mulf %30, %30 : vector<64x256xf32>
    %cst_29 = arith.constant dense<0.000000e+00> : vector<64xf32>
    %32 = vector.multi_reduction <add>, %31, %cst_29 [1] : vector<64x256xf32> to vector<64xf32>
    %33 = vector.shape_cast %32 : vector<64xf32> to vector<64x1xf32>
    %cst_30 = arith.constant 2.560000e+02 : f32
    %34 = vector.broadcast %cst_30 : f32 to vector<64x1xf32>
    %35 = arith.divf %33, %34 : vector<64x1xf32>
    %36 = vector.broadcast %28 : vector<64x1xf32> to vector<64x256xf32>
    %37 = arith.subf %24, %36 : vector<64x256xf32>
    %cst_31 = arith.constant 9.99999974E-6 : f32
    %38 = vector.broadcast %cst_31 : f32 to vector<64x1xf32>
    %39 = arith.addf %35, %38 : vector<64x1xf32>
    %40 = math.rsqrt %39 : vector<64x1xf32>
    %41 = vector.broadcast %40 : vector<64x1xf32> to vector<64x256xf32>
    %42 = arith.mulf %37, %41 : vector<64x256xf32>
    %43 = vector.broadcast %4 : vector<64x1xf32> to vector<64x256xf32>
    %44 = arith.mulf %42, %43 : vector<64x256xf32>
    %45 = vector.broadcast %5 : vector<64x1xf32> to vector<64x256xf32>
    %46 = arith.addf %44, %45 : vector<64x256xf32>
    %cst_32 = arith.constant 0.000000e+00 : f32
    %47 = vector.broadcast %cst_32 : f32 to vector<64x256xf32>
    %48 = arith.maximumf %46, %47 : vector<64x256xf32>
    %49 = arith.truncf %6 : vector<32x64xf32> to vector<32x64xbf16>
    %50 = arith.truncf %48 : vector<64x256xf32> to vector<64x256xbf16>
    %cst_33 = arith.constant dense<0.000000e+00> : vector<32x256xf32>
    %51 = tpu.matmul %49, %50, %cst_33 {dimension_numbers = #tpu.dot_dimension_numbers<[1], [0], [0], [1], [0, 0, 1, 1], [], []>} : vector<32x64xbf16>, vector<64x256xbf16>, vector<32x256xf32> -> vector<32x256xf32>
    %52 = vector.broadcast %7 : vector<32x1xf32> to vector<32x256xf32>
    %53 = arith.addf %51, %52 : vector<32x256xf32>
    %cst_34 = arith.constant dense<0.000000e+00> : vector<32xf32>
    %54 = vector.multi_reduction <add>, %53, %cst_34 [1] : vector<32x256xf32> to vector<32xf32>
    %55 = vector.shape_cast %54 : vector<32xf32> to vector<32x1xf32>
    %cst_35 = arith.constant 2.560000e+02 : f32
    %56 = vector.broadcast %cst_35 : f32 to vector<32x1xf32>
    %57 = arith.divf %55, %56 : vector<32x1xf32>
    %58 = vector.broadcast %57 : vector<32x1xf32> to vector<32x256xf32>
    %59 = arith.subf %53, %58 : vector<32x256xf32>
    %60 = arith.mulf %59, %59 : vector<32x256xf32>
    %cst_36 = arith.constant dense<0.000000e+00> : vector<32xf32>
    %61 = vector.multi_reduction <add>, %60, %cst_36 [1] : vector<32x256xf32> to vector<32xf32>
    %62 = vector.shape_cast %61 : vector<32xf32> to vector<32x1xf32>
    %cst_37 = arith.constant 2.560000e+02 : f32
    %63 = vector.broadcast %cst_37 : f32 to vector<32x1xf32>
    %64 = arith.divf %62, %63 : vector<32x1xf32>
    %65 = vector.broadcast %57 : vector<32x1xf32> to vector<32x256xf32>
    %66 = arith.subf %53, %65 : vector<32x256xf32>
    %cst_38 = arith.constant 9.99999974E-6 : f32
    %67 = vector.broadcast %cst_38 : f32 to vector<32x1xf32>
    %68 = arith.addf %64, %67 : vector<32x1xf32>
    %69 = math.rsqrt %68 : vector<32x1xf32>
    %70 = vector.broadcast %69 : vector<32x1xf32> to vector<32x256xf32>
    %71 = arith.mulf %66, %70 : vector<32x256xf32>
    %72 = vector.broadcast %8 : vector<32x1xf32> to vector<32x256xf32>
    %73 = arith.mulf %71, %72 : vector<32x256xf32>
    %74 = vector.broadcast %9 : vector<32x1xf32> to vector<32x256xf32>
    %75 = arith.addf %73, %74 : vector<32x256xf32>
    %cst_39 = arith.constant 0.000000e+00 : f32
    %76 = vector.broadcast %cst_39 : f32 to vector<32x256xf32>
    %77 = arith.maximumf %75, %76 : vector<32x256xf32>
    %78 = arith.truncf %10 : vector<1x32xf32> to vector<1x32xbf16>
    %79 = arith.truncf %77 : vector<32x256xf32> to vector<32x256xbf16>
    %cst_40 = arith.constant dense<0.000000e+00> : vector<1x256xf32>
    %80 = tpu.matmul %78, %79, %cst_40 {dimension_numbers = #tpu.dot_dimension_numbers<[1], [0], [0], [1], [0, 0, 1, 1], [], []>} : vector<1x32xbf16>, vector<32x256xbf16>, vector<1x256xf32> -> vector<1x256xf32>
    %81 = vector.broadcast %11 : vector<1x1xf32> to vector<1x256xf32>
    %82 = arith.addf %80, %81 : vector<1x256xf32>
    %83 = arith.addf %13, %82 : vector<1x256xf32>
    %c0_41 = arith.constant 0 : index
    %c0_42 = arith.constant 0 : index
    %84 = vector.load %arg12[%c0_41, %c0_42] : memref<1x256xf32, #tpu.memory_space<vmem>>, vector<1x256xf32>
    tpu.vector_store %arg12[%c0_41, %c0_42], %83 {strides = array<i32>} : memref<1x256xf32, #tpu.memory_space<vmem>>, vector<1x256xf32>,
    return
  }
}

</mosaic_0001>

<llo_original>
// kernel: tpu_custom_call.1
$region0: #{tpu_custom_call.1}
  #allocation0 [shape = 'u32[]', space=smem, size = 0x4, offset = 0x4, fixed_abs, tag = 'smem constant byte address 0x4 - core index']
  #allocation1 [shape = 'u32[72,128]{1,0:T(1,128)}', space=vmem, size = 0x9000, scoped, tag = 'internal scratch']
  #allocation2 [shape = 'f32[1,1]{1,0:T(1,128)S(1)}', space=vmem, size = 0x200, scoped, tag = 'scoped memory for tpu_custom_call.1']
  %s0 = inlined_call_operand.vmem [shape: f32[8,256], index: 0, kind: input, shape index: {}]
  %s1 = inlined_call_operand.hbm [shape: f32[8,16,256], index: 1, kind: input, shape index: {}]
  %s2 = inlined_call_operand.vmem [shape: f32[64,8], index: 2, kind: input, shape index: {}]
  %s3 = inlined_call_operand.vmem [shape: f32[64,1], index: 3, kind: input, shape index: {}]
  %s4 = inlined_call_operand.vmem [shape: f32[64,1], index: 4, kind: input, shape index: {}]
  %s5 = inlined_call_operand.vmem [shape: f32[64,1], index: 5, kind: input, shape index: {}]
  %s6 = inlined_call_operand.vmem [shape: f32[32,64], index: 6, kind: input, shape index: {}]
  %s7 = inlined_call_operand.vmem [shape: f32[32,1], index: 7, kind: input, shape index: {}]
  %s8 = inlined_call_operand.vmem [shape: f32[32,1], index: 8, kind: input, shape index: {}]
  %s9 = inlined_call_operand.vmem [shape: f32[32,1], index: 9, kind: input, shape index: {}]
  %s10 = inlined_call_operand.vmem [shape: f32[1,32], index: 10, kind: input, shape index: {}]
  %s11 = inlined_call_operand.<no memory space> [shape: f32[1,1], index: 11, kind: input, shape index: {}]
  %s12 = inlined_call_operand.hbm [shape: f32[1,256], index: 12, kind: output, shape index: {}]
  %s13 = sld [smem:[#allocation0]]
  $region62: #{tpu_custom_call.1} parent=0
    _
  %s15 = ssub.s32 1, %s13
  %s16 = scalar_select 0, %s15, %s13
  %v17 = vstv %s11
  %18 = vst [vmem:[#allocation2] sm:$0x1] %v17
  $region1: #{tpu_custom_call.1} parent=0
    #allocation3 [shape = 'u8[131072]{0}', space=vmem, size = 0x20000, scoped, tag = 'input window, operand 1, single buffered']
    #allocation4 [shape = 's32[1]{0}', space=sflag, size = 0x4, scoped, tag = 'scoped memory for tpu_custom_call.1']
    #allocation5 [shape = 's32[1]{0}', space=sflag, size = 0x4, scoped, tag = 'scoped memory for tpu_custom_call.1']
    #allocation6 [shape = 'u8[1024]{0}', space=vmem, size = 0x400, scoped, tag = 'output window, operand 0, single buffered']
    %19 = vsyncpa [#allocation4], 0
    %20 = vsyncpa [#allocation5], 0
    // Predicated region
    $region2: #{tpu_custom_call.1} parent=1 // pred_check
      _
    $region3: #{tpu_custom_call.1} parent=1 // pred_check_branch
      %22 = sbr.rel (0) target = $region5
    $region4: #{tpu_custom_call.1} parent=1 // pred_region
      _
    $region5: #{tpu_custom_call.1} parent=1 // pred_fallthru
      _
    // Predicated region
    $region6: #{tpu_custom_call.1} parent=1 // pred_check
      _
    $region7: #{tpu_custom_call.1} parent=1 // pred_check_branch
      %24 = sbr.rel (0) target = $region9
    $region8: #{tpu_custom_call.1} parent=1 // pred_region
      %26 = vsyncadd [#allocation4], 0
      %s27 = sshll.u32 %s1, 4
      %s28 = int_to_ptr.hbm [resolvable:$true] %s27
      %s29 = sshll.u32 [#allocation3], 4
      %s30 = int_to_ptr.vmem [resolvable:$true] %s29
      %35 = dma.hbm_to_vmem [thread:$0]  %s28, 4096, %s30, [#allocation4], 256, 256, 16
    $region9: #{tpu_custom_call.1} parent=1 // pred_fallthru
      _
    // Predicated region
    $region10: #{tpu_custom_call.1} parent=1 // pred_check
      _
    $region11: #{tpu_custom_call.1} parent=1 // pred_check_branch
      %37 = sbr.rel (0) target = $region13
    $region12: #{tpu_custom_call.1} parent=1 // pred_region
      _
    $region13: #{tpu_custom_call.1} parent=1 // pred_fallthru
      _
    // Predicated region
    $region14: #{tpu_custom_call.1} parent=1 // pred_check
      _
    $region15: #{tpu_custom_call.1} parent=1 // pred_check_branch
      %39 = sbr.rel (0) target = $region17
    $region16: #{tpu_custom_call.1} parent=1 // pred_region
      _
    $region17: #{tpu_custom_call.1} parent=1 // pred_fallthru
      _
    // Predicated region
    $region18: #{tpu_custom_call.1} parent=1 // pred_check
      _
    $region19: #{tpu_custom_call.1} parent=1 // pred_check_branch
      %41 = sbr.rel (0) target = $region21
    $region20: #{tpu_custom_call.1} parent=1 // pred_region
      _
    $region21: #{tpu_custom_call.1} parent=1 // pred_fallthru
      _
    // Predicated region
    $region22: #{tpu_custom_call.1} parent=1 // pred_check
      _
    $region23: #{tpu_custom_call.1} parent=1 // pred_check_branch
      %43 = sbr.rel (0) target = $region25
    $region24: #{tpu_custom_call.1} parent=1 // pred_region
      _
    $region25: #{tpu_custom_call.1} parent=1 // pred_fallthru
      _
    // Predicated region
    $region26: #{tpu_custom_call.1} parent=1 // pred_check
      _
    $region27: #{tpu_custom_call.1} parent=1 // pred_check_branch
      %45 = sbr.rel (0) target = $region29
    $region28: #{tpu_custom_call.1} parent=1 // pred_region
      _
    $region29: #{tpu_custom_call.1} parent=1 // pred_fallthru
      _
    // Predicated region
    $region30: #{tpu_custom_call.1} parent=1 // pred_check
      _
    $region31: #{tpu_custom_call.1} parent=1 // pred_check_branch
      %47 = sbr.rel (0) target = $region33
    $region32: #{tpu_custom_call.1} parent=1 // pred_region
      _
    $region33: #{tpu_custom_call.1} parent=1 // pred_fallthru
      _
    // Predicated region
    $region34: #{tpu_custom_call.1} parent=1 // pred_check
      _
    $region35: #{tpu_custom_call.1} parent=1 // pred_check_branch
      %49 = sbr.rel (0) target = $region37
    $region36: #{tpu_custom_call.1} parent=1 // pred_region
      _
    $region37: #{tpu_custom_call.1} parent=1 // pred_fallthru
      _
    // Predicated region
    $region38: #{tpu_custom_call.1} parent=1 // pred_check
      _
    $region39: #{tpu_custom_call.1} parent=1 // pred_check_branch
      %51 = sbr.rel (0) target = $region41
    $region40: #{tpu_custom_call.1} parent=1 // pred_region
      _
    $region41: #{tpu_custom_call.1} parent=1 // pred_fallthru
      _
    // Predicated region
    $region42: #{tpu_custom_call.1} parent=1 // pred_check
      _
    $region43: #{tpu_custom_call.1} parent=1 // pred_check_branch
      %53 = sbr.rel (0) target = $region45
    $region44: #{tpu_custom_call.1} parent=1 // pred_region
      _
    $region45: #{tpu_custom_call.1} parent=1 // pred_fallthru
      _
    // Predicated region
    $region46: #{tpu_custom_call.1} parent=1 // pred_check
      _
    $region47: #{tpu_custom_call.1} parent=1 // pred_check_branch
      %55 = sbr.rel (0) target = $region49
    $region48: #{tpu_custom_call.1} parent=1 // pred_region
      _
    $region49: #{tpu_custom_call.1} parent=1 // pred_fallthru
      _
    // Predicated region
    $region50: #{tpu_custom_call.1} parent=1 // pred_check
      _
    $region51: #{tpu_custom_call.1} parent=1 // pred_check_branch
      %57 = sbr.rel (0) target = $region53
    $region52: #{tpu_custom_call.1} parent=1 // pred_region
      %59 = dma.done [#allocation4], 4096
    $region53: #{tpu_custom_call.1} parent=1 // pred_fallthru
      _
    %v61 = vld [vmem:[%s0] sm:$0xff]
    %v62 = vld [vmem:[%s0 + $0x8] sm:$0xff]
    %v63 = vld [vmem:[#allocation3] sm:$0xff]
    %v64 = vld [vmem:[#allocation3 + $0x8] sm:$0xff]
    %v65 = vld [vmem:[#allocation3 + $0x10] sm:$0xff]
    %v66 = vld [vmem:[#allocation3 + $0x18] sm:$0xff]
    %v67 = vld [vmem:[#allocation3 + $0x20] sm:$0xff]
    %v68 = vld [vmem:[#allocation3 + $0x28] sm:$0xff]
    %v69 = vld [vmem:[#allocation3 + $0x30] sm:$0xff]
    %v70 = vld [vmem:[#allocation3 + $0x38] sm:$0xff]
    %v71 = vld [vmem:[#allocation3 + $0x40] sm:$0xff]
    %v72 = vld [vmem:[#allocation3 + $0x48] sm:$0xff]
    %v73 = vld [vmem:[#allocation3 + $0x50] sm:$0xff]
    %v74 = vld [vmem:[#allocation3 + $0x58] sm:$0xff]
    %v75 = vld [vmem:[#allocation3 + $0x60] sm:$0xff]
    %v76 = vld [vmem:[#allocation3 + $0x68] sm:$0xff]
    %v77 = vld [vmem:[#allocation3 + $0x70] sm:$0xff]
    %v78 = vld [vmem:[#allocation3 + $0x78] sm:$0xff]
    %v79 = vld [vmem:[#allocation3 + $0x80] sm:$0xff]
    %v80 = vld [vmem:[#allocation3 + $0x88] sm:$0xff]
    %v81 = vld [vmem:[#allocation3 + $0x90] sm:$0xff]
    %v82 = vld [vmem:[#allocation3 + $0x98] sm:$0xff]
    %v83 = vld [vmem:[#allocation3 + $0xa0] sm:$0xff]
    %v84 = vld [vmem:[#allocation3 + $0xa8] sm:$0xff]
    %v85 = vld [vmem:[#allocation3 + $0xb0] sm:$0xff]
    %v86 = vld [vmem:[#allocation3 + $0xb8] sm:$0xff]
    %v87 = vld [vmem:[#allocation3 + $0xc0] sm:$0xff]
    %v88 = vld [vmem:[#allocation3 + $0xc8] sm:$0xff]
    %v89 = vld [vmem:[#allocation3 + $0xd0] sm:$0xff]
    %v90 = vld [vmem:[#allocation3 + $0xd8] sm:$0xff]
    %v91 = vld [vmem:[#allocation3 + $0xe0] sm:$0xff]
    %v92 = vld [vmem:[#allocation3 + $0xe8] sm:$0xff]
    %v93 = vld [vmem:[#allocation3 + $0xf0] sm:$0xff]
    %v94 = vld [vmem:[#allocation3 + $0xf8] sm:$0xff]
    %v95 = vld [vmem:[%s2] sm:$0xff]
    %v96 = vld [vmem:[%s2 + $0x8] sm:$0xff]
    %v97 = vld [vmem:[%s2 + $0x10] sm:$0xff]
    %v98 = vld [vmem:[%s2 + $0x18] sm:$0xff]
    %v99 = vld [vmem:[%s2 + $0x20] sm:$0xff]
    %v100 = vld [vmem:[%s2 + $0x28] sm:$0xff]
    %v101 = vld [vmem:[%s2 + $0x30] sm:$0xff]
    %v102 = vld [vmem:[%s2 + $0x38] sm:$0xff]
    %v103 = vld [vmem:[%s3] sm:$0xff]
    %v104 = vld [vmem:[%s3 + $0x8] sm:$0xff]
    %v105 = vld [vmem:[%s3 + $0x10] sm:$0xff]
    %v106 = vld [vmem:[%s3 + $0x18] sm:$0xff]
    %v107 = vld [vmem:[%s3 + $0x20] sm:$0xff]
    %v108 = vld [vmem:[%s3 + $0x28] sm:$0xff]
    %v109 = vld [vmem:[%s3 + $0x30] sm:$0xff]
    %v110 = vld [vmem:[%s3 + $0x38] sm:$0xff]
    %v111 = vld [vmem:[%s4] sm:$0xff]
    %v112 = vld [vmem:[%s4 + $0x8] sm:$0xff]
    %v113 = vld [vmem:[%s4 + $0x10] sm:$0xff]
    %v114 = vld [vmem:[%s4 + $0x18] sm:$0xff]
    %v115 = vld [vmem:[%s4 + $0x20] sm:$0xff]
    %v116 = vld [vmem:[%s4 + $0x28] sm:$0xff]
    %v117 = vld [vmem:[%s4 + $0x30] sm:$0xff]
    %v118 = vld [vmem:[%s4 + $0x38] sm:$0xff]
    %v119 = vld [vmem:[%s5] sm:$0xff]
    %v120 = vld [vmem:[%s5 + $0x8] sm:$0xff]
    %v121 = vld [vmem:[%s5 + $0x10] sm:$0xff]
    %v122 = vld [vmem:[%s5 + $0x18] sm:$0xff]
    %v123 = vld [vmem:[%s5 + $0x20] sm:$0xff]
    %v124 = vld [vmem:[%s5 + $0x28] sm:$0xff]
    %v125 = vld [vmem:[%s5 + $0x30] sm:$0xff]
    %v126 = vld [vmem:[%s5 + $0x38] sm:$0xff]
    %v127 = vld [vmem:[%s6] sm:$0xff]
    %v128 = vld [vmem:[%s6 + $0x8] sm:$0xff]
    %v129 = vld [vmem:[%s6 + $0x10] sm:$0xff]
    %v130 = vld [vmem:[%s6 + $0x18] sm:$0xff]
    %v131 = vld [vmem:[%s7] sm:$0xff]
    %v132 = vld [vmem:[%s7 + $0x8] sm:$0xff]
    %v133 = vld [vmem:[%s7 + $0x10] sm:$0xff]
    %v134 = vld [vmem:[%s7 + $0x18] sm:$0xff]
    %v135 = vld [vmem:[%s8] sm:$0xff]
    %v136 = vld [vmem:[%s8 + $0x8] sm:$0xff]
    %v137 = vld [vmem:[%s8 + $0x10] sm:$0xff]
    %v138 = vld [vmem:[%s8 + $0x18] sm:$0xff]
    %v139 = vld [vmem:[%s9] sm:$0xff]
    %v140 = vld [vmem:[%s9 + $0x8] sm:$0xff]
    %v141 = vld [vmem:[%s9 + $0x10] sm:$0xff]
    %v142 = vld [vmem:[%s9 + $0x18] sm:$0xff]
    %v143 = vld [vmem:[%s10] sm:$0x1]
    %v144 = vld [vmem:[#allocation2] sm:$0x1]
    %v145 = vrot.slane %v61, 4
    %v146 = vadd.f32 %v61, %v145
    %v147 = vrot.slane %v146, 2
    %v148 = vadd.f32 %v146, %v147
    %v149 = vrot.slane %v148, 1
    %v150 = vadd.f32 %v148, %v149
    %v151 = vrot.slane %v62, 4
    %v152 = vadd.f32 %v62, %v151
    %v153 = vrot.slane %v152, 2
    %v154 = vadd.f32 %v152, %v153
    %v155 = vrot.slane %v154, 1
    %v156 = vadd.f32 %v154, %v155
    %v157 = vadd.f32 %v63, %v67
    %v158 = vadd.f32 %v157, %v71
    %v159 = vadd.f32 %v158, %v75
    %v160 = vadd.f32 %v159, %v79
    %v161 = vadd.f32 %v160, %v83
    %v162 = vadd.f32 %v161, %v87
    %v163 = vadd.f32 %v162, %v91
    %v164 = vadd.f32 %v64, %v68
    %v165 = vadd.f32 %v164, %v72
    %v166 = vadd.f32 %v165, %v76
    %v167 = vadd.f32 %v166, %v80
    %v168 = vadd.f32 %v167, %v84
    %v169 = vadd.f32 %v168, %v88
    %v170 = vadd.f32 %v169, %v92
    %v171 = vadd.f32 %v65, %v69
    %v172 = vadd.f32 %v171, %v73
    %v173 = vadd.f32 %v172, %v77
    %v174 = vadd.f32 %v173, %v81
    %v175 = vadd.f32 %v174, %v85
    %v176 = vadd.f32 %v175, %v89
    %v177 = vadd.f32 %v176, %v93
    %v178 = vadd.f32 %v66, %v70
    %v179 = vadd.f32 %v178, %v74
    %v180 = vadd.f32 %v179, %v78
    %v181 = vadd.f32 %v180, %v82
    %v182 = vadd.f32 %v181, %v86
    %v183 = vadd.f32 %v182, %v90
    %v184 = vadd.f32 %v183, %v94
    %v185 = vsub.f32 %v163, %v63
    %v186 = vsub.f32 %v170, %v64
    %v187 = vsub.f32 %v177, %v65
    %v188 = vsub.f32 %v184, %v66
    %v189 = vsub.f32 %v163, %v67
    %v190 = vsub.f32 %v170, %v68
    %v191 = vsub.f32 %v177, %v69
    %v192 = vsub.f32 %v184, %v70
    %v193 = vsub.f32 %v163, %v71
    %v194 = vsub.f32 %v170, %v72
    %v195 = vsub.f32 %v177, %v73
    %v196 = vsub.f32 %v184, %v74
    %v197 = vsub.f32 %v163, %v75
    %v198 = vsub.f32 %v170, %v76
    %v199 = vsub.f32 %v177, %v77
    %v200 = vsub.f32 %v184, %v78
    %v201 = vsub.f32 %v163, %v79
    %v202 = vsub.f32 %v170, %v80
    %v203 = vsub.f32 %v177, %v81
    %v204 = vsub.f32 %v184, %v82
    %v205 = vsub.f32 %v163, %v83
    %v206 = vsub.f32 %v170, %v84
    %v207 = vsub.f32 %v177, %v85
    %v208 = vsub.f32 %v184, %v86
    %v209 = vsub.f32 %v163, %v87
    %v210 = vsub.f32 %v170, %v88
    %v211 = vsub.f32 %v177, %v89
    %v212 = vsub.f32 %v184, %v90
    %v213 = vsub.f32 %v163, %v91
    %v214 = vsub.f32 %v170, %v92
    %v215 = vsub.f32 %v177, %v93
    %v216 = vsub.f32 %v184, %v94
    %v217 = vmul.f32 %v63, %v185
    %v218 = vmul.f32 %v64, %v186
    %v219 = vmul.f32 %v65, %v187
    %v220 = vmul.f32 %v66, %v188
    %v221 = vmul.f32 %v67, %v189
    %v222 = vmul.f32 %v68, %v190
    %v223 = vmul.f32 %v69, %v191
    %v224 = vmul.f32 %v70, %v192
    %v225 = vmul.f32 %v71, %v193
    %v226 = vmul.f32 %v72, %v194
    %v227 = vmul.f32 %v73, %v195
    %v228 = vmul.f32 %v74, %v196
    %v229 = vmul.f32 %v75, %v197
    %v230 = vmul.f32 %v76, %v198
    %v231 = vmul.f32 %v77, %v199
    %v232 = vmul.f32 %v78, %v200
    %v233 = vmul.f32 %v79, %v201
    %v234 = vmul.f32 %v80, %v202
    %v235 = vmul.f32 %v81, %v203
    %v236 = vmul.f32 %v82, %v204
    %v237 = vmul.f32 %v83, %v205
    %v238 = vmul.f32 %v84, %v206
    %v239 = vmul.f32 %v85, %v207
    %v240 = vmul.f32 %v86, %v208
    %v241 = vmul.f32 %v87, %v209
    %v242 = vmul.f32 %v88, %v210
    %v243 = vmul.f32 %v89, %v211
    %v244 = vmul.f32 %v90, %v212
    %v245 = vmul.f32 %v91, %v213
    %v246 = vmul.f32 %v92, %v214
    %v247 = vmul.f32 %v93, %v215
    %v248 = vmul.f32 %v94, %v216
    %v249 = vadd.f32 %v217, %v219
    %v250 = vrot.slane %v249, 4
    %v251 = vadd.f32 %v249, %v250
    %v252 = vrot.slane %v251, 2
    %v253 = vadd.f32 %v251, %v252
    %v254 = vrot.slane %v253, 1
    %v255 = vadd.f32 %v253, %v254
    %v256 = vadd.f32 %v218, %v220
    %v257 = vrot.slane %v256, 4
    %v258 = vadd.f32 %v256, %v257
    %v259 = vrot.slane %v258, 2
    %v260 = vadd.f32 %v258, %v259
    %v261 = vrot.slane %v260, 1
    %v262 = vadd.f32 %v260, %v261
    %v263 = vadd.f32 %v221, %v223
    %v264 = vrot.slane %v263, 4
    %v265 = vadd.f32 %v263, %v264
    %v266 = vrot.slane %v265, 2
    %v267 = vadd.f32 %v265, %v266
    %v268 = vrot.slane %v267, 1
    %v269 = vadd.f32 %v267, %v268
    %v270 = vadd.f32 %v222, %v224
    %v271 = vrot.slane %v270, 4
    %v272 = vadd.f32 %v270, %v271
    %v273 = vrot.slane %v272, 2
    %v274 = vadd.f32 %v272, %v273
    %v275 = vrot.slane %v274, 1
    %v276 = vadd.f32 %v274, %v275
    %v277 = vadd.f32 %v225, %v227
    %v278 = vrot.slane %v277, 4
    %v279 = vadd.f32 %v277, %v278
    %v280 = vrot.slane %v279, 2
    %v281 = vadd.f32 %v279, %v280
    %v282 = vrot.slane %v281, 1
    %v283 = vadd.f32 %v281, %v282
    %v284 = vadd.f32 %v226, %v228
    %v285 = vrot.slane %v284, 4
    %v286 = vadd.f32 %v284, %v285
    %v287 = vrot.slane %v286, 2
    %v288 = vadd.f32 %v286, %v287
    %v289 = vrot.slane %v288, 1
    %v290 = vadd.f32 %v288, %v289
    %v291 = vadd.f32 %v229, %v231
    %v292 = vrot.slane %v291, 4
    %v293 = vadd.f32 %v291, %v292
    %v294 = vrot.slane %v293, 2
    %v295 = vadd.f32 %v293, %v294
    %v296 = vrot.slane %v295, 1
    %v297 = vadd.f32 %v295, %v296
    %v298 = vadd.f32 %v230, %v232
    %v299 = vrot.slane %v298, 4
    %v300 = vadd.f32 %v298, %v299
    %v301 = vrot.slane %v300, 2
    %v302 = vadd.f32 %v300, %v301
    %v303 = vrot.slane %v302, 1
    %v304 = vadd.f32 %v302, %v303
    %v305 = vadd.f32 %v233, %v235
    %v306 = vrot.slane %v305, 4
    %v307 = vadd.f32 %v305, %v306
    %v308 = vrot.slane %v307, 2
    %v309 = vadd.f32 %v307, %v308
    %v310 = vrot.slane %v309, 1
    %v311 = vadd.f32 %v309, %v310
    %v312 = vadd.f32 %v234, %v236
    %v313 = vrot.slane %v312, 4
    %v314 = vadd.f32 %v312, %v313
    %v315 = vrot.slane %v314, 2
    %v316 = vadd.f32 %v314, %v315
    %v317 = vrot.slane %v316, 1
    %v318 = vadd.f32 %v316, %v317
    %v319 = vadd.f32 %v237, %v239
    %v320 = vrot.slane %v319, 4
    %v321 = vadd.f32 %v319, %v320
    %v322 = vrot.slane %v321, 2
    %v323 = vadd.f32 %v321, %v322
    %v324 = vrot.slane %v323, 1
    %v325 = vadd.f32 %v323, %v324
    %v326 = vadd.f32 %v238, %v240
    %v327 = vrot.slane %v326, 4
    %v328 = vadd.f32 %v326, %v327
    %v329 = vrot.slane %v328, 2
    %v330 = vadd.f32 %v328, %v329
    %v331 = vrot.slane %v330, 1
    %v332 = vadd.f32 %v330, %v331
    %v333 = vadd.f32 %v241, %v243
    %v334 = vrot.slane %v333, 4
    %v335 = vadd.f32 %v333, %v334
    %v336 = vrot.slane %v335, 2
    %v337 = vadd.f32 %v335, %v336
    %v338 = vrot.slane %v337, 1
    %v339 = vadd.f32 %v337, %v338
    %v340 = vadd.f32 %v242, %v244
    %v341 = vrot.slane %v340, 4
    %v342 = vadd.f32 %v340, %v341
    %v343 = vrot.slane %v342, 2
    %v344 = vadd.f32 %v342, %v343
    %v345 = vrot.slane %v344, 1
    %v346 = vadd.f32 %v344, %v345
    %v347 = vadd.f32 %v245, %v247
    %v348 = vrot.slane %v347, 4
    %v349 = vadd.f32 %v347, %v348
    %v350 = vrot.slane %v349, 2
    %v351 = vadd.f32 %v349, %v350
    %v352 = vrot.slane %v351, 1
    %v353 = vadd.f32 %v351, %v352
    %v354 = vadd.f32 %v246, %v248
    %v355 = vrot.slane %v354, 4
    %v356 = vadd.f32 %v354, %v355
    %v357 = vrot.slane %v356, 2
    %v358 = vadd.f32 %v356, %v357
    %v359 = vrot.slane %v358, 1
    %v360 = vadd.f32 %v358, %v359
    %v361 = vpack.c.bf16 %v96, %v95
    %v362 = vpack.c.bf16 %v98, %v97
    %v363 = vpack.c.bf16 %v100, %v99
    %v364 = vpack.c.bf16 %v102, %v101
    %v365 = vpack.c.bf16 %v255, %v255
    %v366 = vpack.c.bf16 %v262, %v262
    %v367 = vpack.c.bf16 %v269, %v269
    %v368 = vpack.c.bf16 %v276, %v276
    %v369 = vpack.c.bf16 %v283, %v283
    %v370 = vpack.c.bf16 %v290, %v290
    %v371 = vpack.c.bf16 %v297, %v297
    %v372 = vpack.c.bf16 %v304, %v304
    %v373 = vpack.c.bf16 %v311, %v311
    %v374 = vpack.c.bf16 %v318, %v318
    %v375 = vpack.c.bf16 %v325, %v325
    %v376 = vpack.c.bf16 %v332, %v332
    %v377 = vpack.c.bf16 %v339, %v339
    %v378 = vpack.c.bf16 %v346, %v346
    %v379 = vpack.c.bf16 %v353, %v353
    %v380 = vpack.c.bf16 %v360, %v360
    %382 = vset.pattern.permute.xlu0 0
    %383 = vperm.xlu0 %382, %v103
    %v384 = vpop.permute.xlu0 %383
    %387 = vset.pattern.permute.xlu0 0
    %388 = vperm.xlu0 %387, %v104
    %v389 = vpop.permute.xlu0 %388
    %392 = vset.pattern.permute.xlu0 0
    %393 = vperm.xlu0 %392, %v105
    %v394 = vpop.permute.xlu0 %393
    %397 = vset.pattern.permute.xlu0 0
    %398 = vperm.xlu0 %397, %v106
    %v399 = vpop.permute.xlu0 %398
    %402 = vset.pattern.permute.xlu0 0
    %403 = vperm.xlu0 %402, %v107
    %v404 = vpop.permute.xlu0 %403
    %407 = vset.pattern.permute.xlu0 0
    %408 = vperm.xlu0 %407, %v108
    %v409 = vpop.permute.xlu0 %408
    %412 = vset.pattern.permute.xlu0 0
    %413 = vperm.xlu0 %412, %v109
    %v414 = vpop.permute.xlu0 %413
    %417 = vset.pattern.permute.xlu0 0
    %418 = vperm.xlu0 %417, %v110
    %v419 = vpop.permute.xlu0 %418
    %v437 = vunpack.c.l.b16 %v365
    %v438 = vunpack.c.l.b16 %v366
    %v439 = vunpack.c.l.b16 %v367
    %v440 = vunpack.c.l.b16 %v368
    %v441 = vunpack.c.l.b16 %v369
    %v442 = vunpack.c.l.b16 %v370
    %v443 = vunpack.c.l.b16 %v371
    %v444 = vunpack.c.l.b16 %v372
    %v445 = vunpack.c.l.b16 %v373
    %v446 = vunpack.c.l.b16 %v374
    %v447 = vunpack.c.l.b16 %v375
    %v448 = vunpack.c.l.b16 %v376
    %v449 = vunpack.c.l.b16 %v377
    %v450 = vunpack.c.l.b16 %v378
    %v451 = vunpack.c.l.b16 %v379
    %v452 = vunpack.c.l.b16 %v380
    %vm453 = vcmask 1041409
    %v454 = vsel %vm453, %v439, %v437
    %vm455 = vcmask 1042434
    %v456 = vsel %vm455, %v441, %v454
    %vm457 = vcmask 1043459
    %v458 = vsel %vm457, %v443, %v456
    %vm459 = vcmask 1044484
    %v460 = vsel %vm459, %v445, %v458
    %vm461 = vcmask 1045509
    %v462 = vsel %vm461, %v447, %v460
    %vm463 = vcmask 1046534
    %v464 = vsel %vm463, %v449, %v462
    %vm465 = vcmask 1047559
    %v466 = vsel %vm465, %v451, %v464
    %v467 = vsel %vm453, %v440, %v438
    %v468 = vsel %vm455, %v442, %v467
    %v469 = vsel %vm457, %v444, %v468
    %v470 = vsel %vm459, %v446, %v469
    %v471 = vsel %vm461, %v448, %v470
    %v472 = vsel %vm463, %v450, %v471
    %v473 = vsel %vm465, %v452, %v472
    %v474 = vpack.c.b16 %v466, %v466
    %v475 = vpack.c.b16 %v473, %v473
    %vm476 = vcmask 64512
    %v478 = vsel %vm476, %v361, 0
    %v481 = vsel %vm476, %v362, 0
    %v484 = vsel %vm476, %v363, 0
    %v487 = vsel %vm476, %v364, 0
    %vm489 = vcmask 1043456
    %v491 = vsel %vm489, %v474, 0
    %v494 = vsel %vm489, %v475, 0
    %496 = vmatpush.bf16.msra.mxu0 0
    %497 = vmatpush.bf16.msra.mxu0 0
    %498 = vmatpush.bf16.msra.mxu0 0
    %499 = vmatpush.bf16.msra.mxu0 0
    %500 = vmatpush.bf16.msra.mxu0 0
    %501 = vmatpush.bf16.msra.mxu0 0
    %502 = vmatpush.bf16.msra.mxu0 0
    %503 = vmatpush.bf16.msra.mxu0 %v491
    %504 = vmatmul.bf16.gmra.mxu0 %v478
    %v505 = vpop.f32.mrf.mxu0
    %v506 = vadd.f32 %v384, %v505
    %v507 = vpop.f32.mrf.mxu0
    %v508 = vadd.f32 %v389, %v507
    %509 = vmatmul.bf16.gmra.mxu0 %v481
    %v510 = vpop.f32.mrf.mxu0
    %v511 = vadd.f32 %v394, %v510
    %v512 = vpop.f32.mrf.mxu0
    %v513 = vadd.f32 %v399, %v512
    %514 = vmatmul.bf16.gmra.mxu0 %v484
    %v515 = vpop.f32.mrf.mxu0
    %v516 = vadd.f32 %v404, %v515
    %v517 = vpop.f32.mrf.mxu0
    %v518 = vadd.f32 %v409, %v517
    %519 = vmatmul.bf16.gmra.mxu0 %v487
    %v520 = vpop.f32.mrf.mxu0
    %v521 = vadd.f32 %v414, %v520
    %v522 = vpop.f32.mrf.mxu0
    %v523 = vadd.f32 %v419, %v522
    %524 = vdwg.mxu0
    %525 = vmatpush.bf16.msra.mxu0 0
    %526 = vmatpush.bf16.msra.mxu0 0
    %527 = vmatpush.bf16.msra.mxu0 0
    %528 = vmatpush.bf16.msra.mxu0 0
    %529 = vmatpush.bf16.msra.mxu0 0
    %530 = vmatpush.bf16.msra.mxu0 0
    %531 = vmatpush.bf16.msra.mxu0 0
    %532 = vmatpush.bf16.msra.mxu0 %v494
    %533 = vmatmul.bf16.gmra.mxu0 %v478
    %v534 = vpop.f32.mrf.mxu0
    %v535 = vadd.f32 %v384, %v534
    %v536 = vpop.f32.mrf.mxu0
    %v537 = vadd.f32 %v389, %v536
    %538 = vmatmul.bf16.gmra.mxu0 %v481
    %v539 = vpop.f32.mrf.mxu0
    %v540 = vadd.f32 %v394, %v539
    %v541 = vpop.f32.mrf.mxu0
    %v542 = vadd.f32 %v399, %v541
    %543 = vmatmul.bf16.gmra.mxu0 %v484
    %v544 = vpop.f32.mrf.mxu0
    %v545 = vadd.f32 %v404, %v544
    %v546 = vpop.f32.mrf.mxu0
    %v547 = vadd.f32 %v409, %v546
    %548 = vmatmul.bf16.gmra.mxu0 %v487
    %v549 = vpop.f32.mrf.mxu0
    %v550 = vadd.f32 %v414, %v549
    %v551 = vpop.f32.mrf.mxu0
    %v552 = vadd.f32 %v419, %v551
    %553 = vdwg.mxu0
    %v554 = vadd.f32 %v506, %v535
    %555 = vadd.xlane.f32.xlu0 %v554
    %v556 = vpop.xlane.xlu0 %555
    %v557 = vadd.f32 %v508, %v537
    %558 = vadd.xlane.f32.xlu0 %v557
    %v559 = vpop.xlane.xlu0 %558
    %v560 = vadd.f32 %v511, %v540
    %561 = vadd.xlane.f32.xlu0 %v560
    %v562 = vpop.xlane.xlu0 %561
    %v563 = vadd.f32 %v513, %v542
    %564 = vadd.xlane.f32.xlu0 %v563
    %v565 = vpop.xlane.xlu0 %564
    %v566 = vadd.f32 %v516, %v545
    %567 = vadd.xlane.f32.xlu0 %v566
    %v568 = vpop.xlane.xlu0 %567
    %v569 = vadd.f32 %v518, %v547
    %570 = vadd.xlane.f32.xlu0 %v569
    %v571 = vpop.xlane.xlu0 %570
    %v572 = vadd.f32 %v521, %v550
    %573 = vadd.xlane.f32.xlu0 %v572
    %v574 = vpop.xlane.xlu0 %573
    %v575 = vadd.f32 %v523, %v552
    %576 = vadd.xlane.f32.xlu0 %v575
    %v577 = vpop.xlane.xlu0 %576
    %v578 = vrcp.pop 256.0
    %v579 = vmul.f32 256.0, %v578
    %v580 = vsub.f32 1.0, %v579
    %v581 = vmul.f32 %v578, %v580
    %v582 = vadd.f32 %v578, %v581
    %vm583 = vweird.f32 %v578
    %v584 = vsel %vm583, %v578, %v582
    %v585 = vmul.f32 %v556, %v584
    %v586 = vmul.f32 %v559, %v584
    %v587 = vmul.f32 %v562, %v584
    %v588 = vmul.f32 %v565, %v584
    %v589 = vmul.f32 %v568, %v584
    %v590 = vmul.f32 %v571, %v584
    %v591 = vmul.f32 %v574, %v584
    %v592 = vmul.f32 %v577, %v584
    %v593 = vsub.f32 %v506, %v585
    %v594 = vsub.f32 %v535, %v585
    %v595 = vsub.f32 %v508, %v586
    %v596 = vsub.f32 %v537, %v586
    %v597 = vsub.f32 %v511, %v587
    %v598 = vsub.f32 %v540, %v587
    %v599 = vsub.f32 %v513, %v588
    %v600 = vsub.f32 %v542, %v588
    %v601 = vsub.f32 %v516, %v589
    %v602 = vsub.f32 %v545, %v589
    %v603 = vsub.f32 %v518, %v590
    %v604 = vsub.f32 %v547, %v590
    %v605 = vsub.f32 %v521, %v591
    %v606 = vsub.f32 %v550, %v591
    %v607 = vsub.f32 %v523, %v592
    %v608 = vsub.f32 %v552, %v592
    %v609 = vmul.f32 %v593, %v593
    %v610 = vmul.f32 %v594, %v594
    %v611 = vmul.f32 %v595, %v595
    %v612 = vmul.f32 %v596, %v596
    %v613 = vmul.f32 %v597, %v597
    %v614 = vmul.f32 %v598, %v598
    %v615 = vmul.f32 %v599, %v599
    %v616 = vmul.f32 %v600, %v600
    %v617 = vmul.f32 %v601, %v601
    %v618 = vmul.f32 %v602, %v602
    %v619 = vmul.f32 %v603, %v603
    %v620 = vmul.f32 %v604, %v604
    %v621 = vmul.f32 %v605, %v605
    %v622 = vmul.f32 %v606, %v606
    %v623 = vmul.f32 %v607, %v607
    %v624 = vmul.f32 %v608, %v608
    %v625 = vadd.f32 %v609, %v610
    %626 = vadd.xlane.f32.xlu0 %v625
    %v627 = vpop.xlane.xlu0 %626
    %v628 = vadd.f32 %v611, %v612
    %629 = vadd.xlane.f32.xlu0 %v628
    %v630 = vpop.xlane.xlu0 %629
    %v631 = vadd.f32 %v613, %v614
    %632 = vadd.xlane.f32.xlu0 %v631
    %v633 = vpop.xlane.xlu0 %632
    %v634 = vadd.f32 %v615, %v616
    %635 = vadd.xlane.f32.xlu0 %v634
    %v636 = vpop.xlane.xlu0 %635
    %v637 = vadd.f32 %v617, %v618
    %638 = vadd.xlane.f32.xlu0 %v637
    %v639 = vpop.xlane.xlu0 %638
    %v640 = vadd.f32 %v619, %v620
    %641 = vadd.xlane.f32.xlu0 %v640
    %v642 = vpop.xlane.xlu0 %641
    %v643 = vadd.f32 %v621, %v622
    %644 = vadd.xlane.f32.xlu0 %v643
    %v645 = vpop.xlane.xlu0 %644
    %v646 = vadd.f32 %v623, %v624
    %647 = vadd.xlane.f32.xlu0 %v646
    %v648 = vpop.xlane.xlu0 %647
    %v649 = vmul.f32 %v627, %v584
    %v650 = vmul.f32 %v630, %v584
    %v651 = vmul.f32 %v633, %v584
    %v652 = vmul.f32 %v636, %v584
    %v653 = vmul.f32 %v639, %v584
    %v654 = vmul.f32 %v642, %v584
    %v655 = vmul.f32 %v645, %v584
    %v656 = vmul.f32 %v648, %v584
    %v657 = vadd.f32 %v649, 1e-05
    %v658 = vadd.f32 %v650, 1e-05
    %v659 = vadd.f32 %v651, 1e-05
    %v660 = vadd.f32 %v652, 1e-05
    %v661 = vadd.f32 %v653, 1e-05
    %v662 = vadd.f32 %v654, 1e-05
    %v663 = vadd.f32 %v655, 1e-05
    %v664 = vadd.f32 %v656, 1e-05
    %v665 = vrsqrt.pop %v657
    %v666 = vmul.f32 %v665, %v657
    %v667 = vmul.f32 %v666, %v665
    %v668 = vmul.f32 0.5, %v667
    %v669 = vsub.f32 1.5, %v668
    %v670 = vmul.f32 %v665, %v669
    %vm671 = vweird.f32 %v657
    %vm672 = vweird.f32 %v665
    %vm673 = vmor %vm671, %vm672
    %v674 = vsel %vm673, %v665, %v670
    %v675 = vrsqrt.pop %v658
    %v676 = vmul.f32 %v675, %v658
    %v677 = vmul.f32 %v676, %v675
    %v678 = vmul.f32 0.5, %v677
    %v679 = vsub.f32 1.5, %v678
    %v680 = vmul.f32 %v675, %v679
    %vm681 = vweird.f32 %v658
    %vm682 = vweird.f32 %v675
    %vm683 = vmor %vm681, %vm682
    %v684 = vsel %vm683, %v675, %v680
    %v685 = vrsqrt.pop %v659
    %v686 = vmul.f32 %v685, %v659
    %v687 = vmul.f32 %v686, %v685
    %v688 = vmul.f32 0.5, %v687
    %v689 = vsub.f32 1.5, %v688
    %v690 = vmul.f32 %v685, %v689
    %vm691 = vweird.f32 %v659
    %vm692 = vweird.f32 %v685
    %vm693 = vmor %vm691, %vm692
    %v694 = vsel %vm693, %v685, %v690
    %v695 = vrsqrt.pop %v660
    %v696 = vmul.f32 %v695, %v660
    %v697 = vmul.f32 %v696, %v695
    %v698 = vmul.f32 0.5, %v697
    %v699 = vsub.f32 1.5, %v698
    %v700 = vmul.f32 %v695, %v699
    %vm701 = vweird.f32 %v660
    %vm702 = vweird.f32 %v695
    %vm703 = vmor %vm701, %vm702
    %v704 = vsel %vm703, %v695, %v700
    %v705 = vrsqrt.pop %v661
    %v706 = vmul.f32 %v705, %v661
    %v707 = vmul.f32 %v706, %v705
    %v708 = vmul.f32 0.5, %v707
    %v709 = vsub.f32 1.5, %v708
    %v710 = vmul.f32 %v705, %v709
    %vm711 = vweird.f32 %v661
    %vm712 = vweird.f32 %v705
    %vm713 = vmor %vm711, %vm712
    %v714 = vsel %vm713, %v705, %v710
    %v715 = vrsqrt.pop %v662
    %v716 = vmul.f32 %v715, %v662
    %v717 = vmul.f32 %v716, %v715
    %v718 = vmul.f32 0.5, %v717
    %v719 = vsub.f32 1.5, %v718
    %v720 = vmul.f32 %v715, %v719
    %vm721 = vweird.f32 %v662
    %vm722 = vweird.f32 %v715
    %vm723 = vmor %vm721, %vm722
    %v724 = vsel %vm723, %v715, %v720
    %v725 = vrsqrt.pop %v663
    %v726 = vmul.f32 %v725, %v663
    %v727 = vmul.f32 %v726, %v725
    %v728 = vmul.f32 0.5, %v727
    %v729 = vsub.f32 1.5, %v728
    %v730 = vmul.f32 %v725, %v729
    %vm731 = vweird.f32 %v663
    %vm732 = vweird.f32 %v725
    %vm733 = vmor %vm731, %vm732
    %v734 = vsel %vm733, %v725, %v730
    %v735 = vrsqrt.pop %v664
    %v736 = vmul.f32 %v735, %v664
    %v737 = vmul.f32 %v736, %v735
    %v738 = vmul.f32 0.5, %v737
    %v739 = vsub.f32 1.5, %v738
    %v740 = vmul.f32 %v735, %v739
    %vm741 = vweird.f32 %v664
    %vm742 = vweird.f32 %v735
    %vm743 = vmor %vm741, %vm742
    %v744 = vsel %vm743, %v735, %v740
    %v745 = vmul.f32 %v593, %v674
    %v746 = vmul.f32 %v594, %v674
    %v747 = vmul.f32 %v595, %v684
    %v748 = vmul.f32 %v596, %v684
    %v749 = vmul.f32 %v597, %v694
    %v750 = vmul.f32 %v598, %v694
    %v751 = vmul.f32 %v599, %v704
    %v752 = vmul.f32 %v600, %v704
    %v753 = vmul.f32 %v601, %v714
    %v754 = vmul.f32 %v602, %v714
    %v755 = vmul.f32 %v603, %v724
    %v756 = vmul.f32 %v604, %v724
    %v757 = vmul.f32 %v605, %v734
    %v758 = vmul.f32 %v606, %v734
    %v759 = vmul.f32 %v607, %v744
    %v760 = vmul.f32 %v608, %v744
    %762 = vset.pattern.permute.xlu0 0
    %763 = vperm.xlu0 %762, %v111
    %v764 = vpop.permute.xlu0 %763
    %767 = vset.pattern.permute.xlu0 0
    %768 = vperm.xlu0 %767, %v112
    %v769 = vpop.permute.xlu0 %768
    %772 = vset.pattern.permute.xlu0 0
    %773 = vperm.xlu0 %772, %v113
    %v774 = vpop.permute.xlu0 %773
    %777 = vset.pattern.permute.xlu0 0
    %778 = vperm.xlu0 %777, %v114
    %v779 = vpop.permute.xlu0 %778
    %782 = vset.pattern.permute.xlu0 0
    %783 = vperm.xlu0 %782, %v115
    %v784 = vpop.permute.xlu0 %783
    %787 = vset.pattern.permute.xlu0 0
    %788 = vperm.xlu0 %787, %v116
    %v789 = vpop.permute.xlu0 %788
    %792 = vset.pattern.permute.xlu0 0
    %793 = vperm.xlu0 %792, %v117
    %v794 = vpop.permute.xlu0 %793
    %797 = vset.pattern.permute.xlu0 0
    %798 = vperm.xlu0 %797, %v118
    %v799 = vpop.permute.xlu0 %798
    %v801 = vmul.f32 %v745, %v764
    %v802 = vmul.f32 %v746, %v764
    %v803 = vmul.f32 %v747, %v769
    %v804 = vmul.f32 %v748, %v769
    %v805 = vmul.f32 %v749, %v774
    %v806 = vmul.f32 %v750, %v774
    %v807 = vmul.f32 %v751, %v779
    %v808 = vmul.f32 %v752, %v779
    %v809 = vmul.f32 %v753, %v784
    %v810 = vmul.f32 %v754, %v784
    %v811 = vmul.f32 %v755, %v789
    %v812 = vmul.f32 %v756, %v789
    %v813 = vmul.f32 %v757, %v794
    %v814 = vmul.f32 %v758, %v794
    %v815 = vmul.f32 %v759, %v799
    %v816 = vmul.f32 %v760, %v799
    %818 = vset.pattern.permute.xlu0 0
    %819 = vperm.xlu0 %818, %v119
    %v820 = vpop.permute.xlu0 %819
    %823 = vset.pattern.permute.xlu0 0
    %824 = vperm.xlu0 %823, %v120
    %v825 = vpop.permute.xlu0 %824
    %828 = vset.pattern.permute.xlu0 0
    %829 = vperm.xlu0 %828, %v121
    %v830 = vpop.permute.xlu0 %829
    %833 = vset.pattern.permute.xlu0 0
    %834 = vperm.xlu0 %833, %v122
    %v835 = vpop.permute.xlu0 %834
    %838 = vset.pattern.permute.xlu0 0
    %839 = vperm.xlu0 %838, %v123
    %v840 = vpop.permute.xlu0 %839
    %843 = vset.pattern.permute.xlu0 0
    %844 = vperm.xlu0 %843, %v124
    %v845 = vpop.permute.xlu0 %844
    %848 = vset.pattern.permute.xlu0 0
    %849 = vperm.xlu0 %848, %v125
    %v850 = vpop.permute.xlu0 %849
    %853 = vset.pattern.permute.xlu0 0
    %854 = vperm.xlu0 %853, %v126
    %v855 = vpop.permute.xlu0 %854
    %v857 = vadd.f32 %v801, %v820
    %v858 = vadd.f32 %v802, %v820
    %v859 = vadd.f32 %v803, %v825
    %v860 = vadd.f32 %v804, %v825
    %v861 = vadd.f32 %v805, %v830
    %v862 = vadd.f32 %v806, %v830
    %v863 = vadd.f32 %v807, %v835
    %v864 = vadd.f32 %v808, %v835
    %v865 = vadd.f32 %v809, %v840
    %v866 = vadd.f32 %v810, %v840
    %v867 = vadd.f32 %v811, %v845
    %v868 = vadd.f32 %v812, %v845
    %v869 = vadd.f32 %v813, %v850
    %v870 = vadd.f32 %v814, %v850
    %v871 = vadd.f32 %v815, %v855
    %v872 = vadd.f32 %v816, %v855
    %v873 = vmax.f32 %v857, 0.0
    %v874 = vmax.f32 %v858, 0.0
    %v875 = vmax.f32 %v859, 0.0
    %v876 = vmax.f32 %v860, 0.0
    %v877 = vmax.f32 %v861, 0.0
    %v878 = vmax.f32 %v862, 0.0
    %v879 = vmax.f32 %v863, 0.0
    %v880 = vmax.f32 %v864, 0.0
    %v881 = vmax.f32 %v865, 0.0
    %v882 = vmax.f32 %v866, 0.0
    %v883 = vmax.f32 %v867, 0.0
    %v884 = vmax.f32 %v868, 0.0
    %v885 = vmax.f32 %v869, 0.0
    %v886 = vmax.f32 %v870, 0.0
    %v887 = vmax.f32 %v871, 0.0
    %v888 = vmax.f32 %v872, 0.0
    %v889 = vpack.c.bf16 %v128, %v127
    %v890 = vpack.c.bf16 %v130, %v129
    %v891 = vpack.c.bf16 %v875, %v873
    %v892 = vpack.c.bf16 %v876, %v874
    %v893 = vpack.c.bf16 %v879, %v877
    %v894 = vpack.c.bf16 %v880, %v878
    %v895 = vpack.c.bf16 %v883, %v881
    %v896 = vpack.c.bf16 %v884, %v882
    %v897 = vpack.c.bf16 %v887, %v885
    %v898 = vpack.c.bf16 %v888, %v886
    %900 = vset.pattern.permute.xlu0 0
    %901 = vperm.xlu0 %900, %v131
    %v902 = vpop.permute.xlu0 %901
    %905 = vset.pattern.permute.xlu0 0
    %906 = vperm.xlu0 %905, %v132
    %v907 = vpop.permute.xlu0 %906
    %910 = vset.pattern.permute.xlu0 0
    %911 = vperm.xlu0 %910, %v133
    %v912 = vpop.permute.xlu0 %911
    %915 = vset.pattern.permute.xlu0 0
    %916 = vperm.xlu0 %915, %v134
    %v917 = vpop.permute.xlu0 %916
    %vm919 = vcmask 523264
    %v921 = vsel %vm919, %v889, 0
    %v924 = vsel %vm919, %v890, 0
    %926 = vmatpush.bf16.msra.mxu0 0
    %927 = vmatpush.bf16.msra.mxu0 0
    %928 = vmatpush.bf16.msra.mxu0 0
    %929 = vmatpush.bf16.msra.mxu0 0
    %930 = vmatpush.bf16.msra.mxu0 %v897
    %931 = vmatpush.bf16.msra.mxu0 %v895
    %932 = vmatpush.bf16.msra.mxu0 %v893
    %933 = vmatpush.bf16.msra.mxu0 %v891
    %934 = vmatmul.bf16.gmra.mxu0 %v921
    %v935 = vpop.f32.mrf.mxu0
    %v936 = vadd.f32 %v902, %v935
    %v937 = vpop.f32.mrf.mxu0
    %v938 = vadd.f32 %v907, %v937
    %939 = vmatmul.bf16.gmra.mxu0 %v924
    %v940 = vpop.f32.mrf.mxu0
    %v941 = vadd.f32 %v912, %v940
    %v942 = vpop.f32.mrf.mxu0
    %v943 = vadd.f32 %v917, %v942
    %944 = vdwg.mxu0
    %945 = vmatpush.bf16.msra.mxu0 0
    %946 = vmatpush.bf16.msra.mxu0 0
    %947 = vmatpush.bf16.msra.mxu0 0
    %948 = vmatpush.bf16.msra.mxu0 0
    %949 = vmatpush.bf16.msra.mxu0 %v898
    %950 = vmatpush.bf16.msra.mxu0 %v896
    %951 = vmatpush.bf16.msra.mxu0 %v894
    %952 = vmatpush.bf16.msra.mxu0 %v892
    %953 = vmatmul.bf16.gmra.mxu0 %v921
    %v954 = vpop.f32.mrf.mxu0
    %v955 = vadd.f32 %v902, %v954
    %v956 = vpop.f32.mrf.mxu0
    %v957 = vadd.f32 %v907, %v956
    %958 = vmatmul.bf16.gmra.mxu0 %v924
    %v959 = vpop.f32.mrf.mxu0
    %v960 = vadd.f32 %v912, %v959
    %v961 = vpop.f32.mrf.mxu0
    %v962 = vadd.f32 %v917, %v961
    %963 = vdwg.mxu0
    %v964 = vadd.f32 %v936, %v955
    %965 = vadd.xlane.f32.xlu0 %v964
    %v966 = vpop.xlane.xlu0 %965
    %v967 = vadd.f32 %v938, %v957
    %968 = vadd.xlane.f32.xlu0 %v967
    %v969 = vpop.xlane.xlu0 %968
    %v970 = vadd.f32 %v941, %v960
    %971 = vadd.xlane.f32.xlu0 %v970
    %v972 = vpop.xlane.xlu0 %971
    %v973 = vadd.f32 %v943, %v962
    %974 = vadd.xlane.f32.xlu0 %v973
    %v975 = vpop.xlane.xlu0 %974
    %v976 = vmul.f32 %v966, %v584
    %v977 = vmul.f32 %v969, %v584
    %v978 = vmul.f32 %v972, %v584
    %v979 = vmul.f32 %v975, %v584
    %v980 = vsub.f32 %v936, %v976
    %v981 = vsub.f32 %v955, %v976
    %v982 = vsub.f32 %v938, %v977
    %v983 = vsub.f32 %v957, %v977
    %v984 = vsub.f32 %v941, %v978
    %v985 = vsub.f32 %v960, %v978
    %v986 = vsub.f32 %v943, %v979
    %v987 = vsub.f32 %v962, %v979
    %v988 = vmul.f32 %v980, %v980
    %v989 = vmul.f32 %v981, %v981
    %v990 = vmul.f32 %v982, %v982
    %v991 = vmul.f32 %v983, %v983
    %v992 = vmul.f32 %v984, %v984
    %v993 = vmul.f32 %v985, %v985
    %v994 = vmul.f32 %v986, %v986
    %v995 = vmul.f32 %v987, %v987
    %v996 = vadd.f32 %v988, %v989
    %997 = vadd.xlane.f32.xlu0 %v996
    %v998 = vpop.xlane.xlu0 %997
    %v999 = vadd.f32 %v990, %v991
    %1000 = vadd.xlane.f32.xlu0 %v999
    %v1001 = vpop.xlane.xlu0 %1000
    %v1002 = vadd.f32 %v992, %v993
    %1003 = vadd.xlane.f32.xlu0 %v1002
    %v1004 = vpop.xlane.xlu0 %1003
    %v1005 = vadd.f32 %v994, %v995
    %1006 = vadd.xlane.f32.xlu0 %v1005
    %v1007 = vpop.xlane.xlu0 %1006
    %v1008 = vmul.f32 %v998, %v584
    %v1009 = vmul.f32 %v1001, %v584
    %v1010 = vmul.f32 %v1004, %v584
    %v1011 = vmul.f32 %v1007, %v584
    %v1012 = vadd.f32 %v1008, 1e-05
    %v1013 = vadd.f32 %v1009, 1e-05
    %v1014 = vadd.f32 %v1010, 1e-05
    %v1015 = vadd.f32 %v1011, 1e-05
    %v1016 = vrsqrt.pop %v1012
    %v1017 = vmul.f32 %v1016, %v1012
    %v1018 = vmul.f32 %v1017, %v1016
    %v1019 = vmul.f32 0.5, %v1018
    %v1020 = vsub.f32 1.5, %v1019
    %v1021 = vmul.f32 %v1016, %v1020
    %vm1022 = vweird.f32 %v1012
    %vm1023 = vweird.f32 %v1016
    %vm1024 = vmor %vm1022, %vm1023
    %v1025 = vsel %vm1024, %v1016, %v1021
    %v1026 = vrsqrt.pop %v1013
    %v1027 = vmul.f32 %v1026, %v1013
    %v1028 = vmul.f32 %v1027, %v1026
    %v1029 = vmul.f32 0.5, %v1028
    %v1030 = vsub.f32 1.5, %v1029
    %v1031 = vmul.f32 %v1026, %v1030
    %vm1032 = vweird.f32 %v1013
    %vm1033 = vweird.f32 %v1026
    %vm1034 = vmor %vm1032, %vm1033
    %v1035 = vsel %vm1034, %v1026, %v1031
    %v1036 = vrsqrt.pop %v1014
    %v1037 = vmul.f32 %v1036, %v1014
    %v1038 = vmul.f32 %v1037, %v1036
    %v1039 = vmul.f32 0.5, %v1038
    %v1040 = vsub.f32 1.5, %v1039
    %v1041 = vmul.f32 %v1036, %v1040
    %vm1042 = vweird.f32 %v1014
    %vm1043 = vweird.f32 %v1036
    %vm1044 = vmor %vm1042, %vm1043
    %v1045 = vsel %vm1044, %v1036, %v1041
    %v1046 = vrsqrt.pop %v1015
    %v1047 = vmul.f32 %v1046, %v1015
    %v1048 = vmul.f32 %v1047, %v1046
    %v1049 = vmul.f32 0.5, %v1048
    %v1050 = vsub.f32 1.5, %v1049
    %v1051 = vmul.f32 %v1046, %v1050
    %vm1052 = vweird.f32 %v1015
    %vm1053 = vweird.f32 %v1046
    %vm1054 = vmor %vm1052, %vm1053
    %v1055 = vsel %vm1054, %v1046, %v1051
    %v1056 = vmul.f32 %v980, %v1025
    %v1057 = vmul.f32 %v981, %v1025
    %v1058 = vmul.f32 %v982, %v1035
    %v1059 = vmul.f32 %v983, %v1035
    %v1060 = vmul.f32 %v984, %v1045
    %v1061 = vmul.f32 %v985, %v1045
    %v1062 = vmul.f32 %v986, %v1055
    %v1063 = vmul.f32 %v987, %v1055
    %1065 = vset.pattern.permute.xlu0 0
    %1066 = vperm.xlu0 %1065, %v135
    %v1067 = vpop.permute.xlu0 %1066
    %1070 = vset.pattern.permute.xlu0 0
    %1071 = vperm.xlu0 %1070, %v136
    %v1072 = vpop.permute.xlu0 %1071
    %1075 = vset.pattern.permute.xlu0 0
    %1076 = vperm.xlu0 %1075, %v137
    %v1077 = vpop.permute.xlu0 %1076
    %1080 = vset.pattern.permute.xlu0 0
    %1081 = vperm.xlu0 %1080, %v138
    %v1082 = vpop.permute.xlu0 %1081
    %v1084 = vmul.f32 %v1056, %v1067
    %v1085 = vmul.f32 %v1057, %v1067
    %v1086 = vmul.f32 %v1058, %v1072
    %v1087 = vmul.f32 %v1059, %v1072
    %v1088 = vmul.f32 %v1060, %v1077
    %v1089 = vmul.f32 %v1061, %v1077
    %v1090 = vmul.f32 %v1062, %v1082
    %v1091 = vmul.f32 %v1063, %v1082
    %1093 = vset.pattern.permute.xlu0 0
    %1094 = vperm.xlu0 %1093, %v139
    %v1095 = vpop.permute.xlu0 %1094
    %1098 = vset.pattern.permute.xlu0 0
    %1099 = vperm.xlu0 %1098, %v140
    %v1100 = vpop.permute.xlu0 %1099
    %1103 = vset.pattern.permute.xlu0 0
    %1104 = vperm.xlu0 %1103, %v141
    %v1105 = vpop.permute.xlu0 %1104
    %1108 = vset.pattern.permute.xlu0 0
    %1109 = vperm.xlu0 %1108, %v142
    %v1110 = vpop.permute.xlu0 %1109
    %v1112 = vadd.f32 %v1084, %v1095
    %v1113 = vadd.f32 %v1085, %v1095
    %v1114 = vadd.f32 %v1086, %v1100
    %v1115 = vadd.f32 %v1087, %v1100
    %v1116 = vadd.f32 %v1088, %v1105
    %v1117 = vadd.f32 %v1089, %v1105
    %v1118 = vadd.f32 %v1090, %v1110
    %v1119 = vadd.f32 %v1091, %v1110
    %v1120 = vmax.f32 %v1112, 0.0
    %v1121 = vmax.f32 %v1113, 0.0
    %v1122 = vmax.f32 %v1114, 0.0
    %v1123 = vmax.f32 %v1115, 0.0
    %v1124 = vmax.f32 %v1116, 0.0
    %v1125 = vmax.f32 %v1117, 0.0
    %v1126 = vmax.f32 %v1118, 0.0
    %v1127 = vmax.f32 %v1119, 0.0
    %v1128 = vpack.c.bf16 %v143, %v143
    %v1129 = vpack.c.bf16 %v1122, %v1120
    %v1130 = vpack.c.bf16 %v1123, %v1121
    %v1131 = vpack.c.bf16 %v1126, %v1124
    %v1132 = vpack.c.bf16 %v1127, %v1125
    %1134 = vset.pattern.permute.xlu0 0
    %1135 = vperm.xlu0 %1134, %v144
    %v1136 = vpop.permute.xlu0 %1135
    %v1138 = vperm.slane %v1136, 0
    %vm1139 = vcmask 261120
    %v1141 = vsel %vm1139, %v1128, 0
    %1143 = vmatpush.bf16.msra.mxu0 0
    %1144 = vmatpush.bf16.msra.mxu0 0
    %1145 = vmatpush.bf16.msra.mxu0 0
    %1146 = vmatpush.bf16.msra.mxu0 0
    %1147 = vmatpush.bf16.msra.mxu0 0
    %1148 = vmatpush.bf16.msra.mxu0 0
    %1149 = vmatpush.bf16.msra.mxu0 %v1131
    %1150 = vmatpush.bf16.msra.mxu0 %v1129
    %1151 = vmatmul.bf16.gmra.mxu0 %v1141
    %v1152 = vpop.f32.mrf.mxu0
    %v1153 = vadd.f32 %v1138, %v1152
    %v1154 = vpop.f32.mrf.mxu0
    %1155 = vdwg.mxu0
    %1156 = vmatpush.bf16.msra.mxu0 0
    %1157 = vmatpush.bf16.msra.mxu0 0
    %1158 = vmatpush.bf16.msra.mxu0 0
    %1159 = vmatpush.bf16.msra.mxu0 0
    %1160 = vmatpush.bf16.msra.mxu0 0
    %1161 = vmatpush.bf16.msra.mxu0 0
    %1162 = vmatpush.bf16.msra.mxu0 %v1132
    %1163 = vmatpush.bf16.msra.mxu0 %v1130
    %1164 = vmatmul.bf16.gmra.mxu0 %v1141
    %v1165 = vpop.f32.mrf.mxu0
    %v1166 = vadd.f32 %v1138, %v1165
    %v1167 = vpop.f32.mrf.mxu0
    %1168 = vdwg.mxu0
    %v1169 = vadd.f32 %v150, %v1153
    %v1170 = vadd.f32 %v156, %v1166
    %v1173 = vrot.slane %v1170, 7
    %vm1174 = vcmask 1040384
    %v1175 = vsel %vm1174, %v1169, %v1173
    %v1177 = vlaneseq
    %vm1178 = vcmp.ge.s32.totalorder %v1177, 0
    %vm1179 = vcmp.lt.s32.totalorder %v1177, 256
    %vm1180 = vmand %vm1178, %vm1179
    %1181 = vst.msk [vmem:[#allocation6] sm:$0x3] %vm1180, %v1175
    // Predicated region
    $region54: #{tpu_custom_call.1} parent=1 // pred_check
      _
    $region55: #{tpu_custom_call.1} parent=1 // pred_check_branch
      %1183 = sbr.rel (0) target = $region57
    $region56: #{tpu_custom_call.1} parent=1 // pred_region
      %1185 = vsyncadd [#allocation5], 0
      %s1187 = sshll.u32 [#allocation6], 4
      %s1188 = int_to_ptr.vmem [resolvable:$true] %s1187
      %s1189 = sshll.u32 %s12, 4
      %s1190 = int_to_ptr.hbm [resolvable:$true] %s1189
      %1192 = dma.vmem_to_hbm [thread:$0]  %s1188, 32, %s1190, [#allocation5]
    $region57: #{tpu_custom_call.1} parent=1 // pred_fallthru
      _
    // Predicated region
    $region58: #{tpu_custom_call.1} parent=1 // pred_check
      _
    $region59: #{tpu_custom_call.1} parent=1 // pred_check_branch
      %1194 = sbr.rel (0) target = $region61
    $region60: #{tpu_custom_call.1} parent=1 // pred_region
      %1196 = dma.done [#allocation5], 32
    $region61: #{tpu_custom_call.1} parent=1 // pred_fallthru
      _
    %1197 = vsyncpa [#allocation4], 1
    %1198 = vsyncpa [#allocation5], 1

</llo_original>
